<compile_context>
chip_gen: v7x
topology: tpu7x:2x2x1
jax: 0.10.0
libtpu: 0.0.40
codegen_flags: <defaults>
</compile_context>

<pallas_src>
import jax
import jax.numpy as jnp
from jax import lax
from jax.experimental import pallas as pl
from jax.experimental.pallas import tpu as pltpu

# ----------------------------- problem sizes --------------------------------
N, C_IN, H, W = 2, 4, 16, 16
C_OUT = 8
K, S = 3, 2
H_OUT = (H - K) // S + 1          # 7
W_OUT = (W - K) // S + 1          # 7
KDIM = K * K * C_IN               # 36 (im2col contraction dim)
C_TOT = C_OUT + C_IN              # 12 (concat channels)
WO_PAD = 8                        # Wo padded 7 -> 8 (sublane multiple)
C_PAD = 128                       # channels padded 12 -> 128 (lane-dense store)
BN_EPS = 1e-5


# ------------------------------ Pallas kernel --------------------------------
def downsample_kernel(x_ref, w_ref, b_ref, o_ref):
    """One (batch n, output row i) tile.

    x_ref: (H, 2, W//2, C_IN)  image n, W phase-split: x[h, w%2, w//2, c]
    w_ref: (KDIM, C_OUT)       im2col conv weights with BN scale folded in
    b_ref: (1, C_OUT)          folded bias ((b - mean)*scale + beta)
    o_ref: (WO_PAD, C_PAD)     output row i, lane/sublane padded
    """
    i = pl.program_id(1)
    row_start = pl.multiple_of(S * i, S)
    # 3 input rows feeding output row i (dynamic slice on a leading dim).
    rows = x_ref[pl.ds(row_start, K), :, :, :]              # (3, 2, W//2, C_IN)

    # In-VMEM im2col: 9 contiguous window slices, each (W_OUT, C_IN).
    # sub[(kh,kw)][j, c] == x[n, c, 2i+kh, 2j+kw]
    subs = []
    for kh in range(K):
        for kw in range(K):
            subs.append(rows[kh, kw % 2, kw // 2: kw // 2 + W_OUT, :])

    # Conv branch: one MXU matmul, then folded-bias add + ReLU.
    patches = jnp.concatenate(subs, axis=-1)                # (W_OUT, KDIM)
    conv = jnp.dot(patches, w_ref[...], preferred_element_type=jnp.float32)
    y1 = jnp.maximum(conv + b_ref[...], 0.0)                # (W_OUT, C_OUT)

    # Max-pool branch from the SAME window slices (no extra input/HBM traffic).
    y2 = subs[0]
    for s in subs[1:]:
        y2 = jnp.maximum(y2, s)                             # (W_OUT, C_IN)

    # Channel concat + pad to a full (WO_PAD, C_PAD) vreg -> one dense store.
    row = jnp.concatenate(
        [y1, y2, jnp.zeros((W_OUT, C_PAD - C_TOT), jnp.float32)], axis=-1)
    o_ref[...] = jnp.concatenate(
        [row, jnp.zeros((WO_PAD - W_OUT, C_PAD), jnp.float32)], axis=0)


# ------------------------------ host wrapper ----------------------------------
def downsample_forward(x_nchw, params):
    """x_nchw: (N, C_IN, H, W) float32 -> (N, C_OUT + C_IN, H_OUT, W_OUT)."""
    w, b, gamma, beta, run_mean, run_var = (
        params["w"], params["b"], params["gamma"], params["beta"],
        params["mean"], params["var"],
    )

    # Layout plumbing only (same byte count as the input, no im2col inflation):
    # NCHW -> (N, H, 2, W//2, C) so every stride-2 window slice in the kernel
    # is a contiguous slice.
    x_prep = jnp.transpose(
        x_nchw.reshape(N, C_IN, H, W // 2, 2), (0, 2, 4, 3, 1))

    # Conv weight OIHW -> (kh, kw, cin, cout) -> (KDIM, C_OUT); matches the
    # kernel's patch lane order ((kh*3 + kw)*C_IN + cin).
    w_mat = jnp.transpose(w, (2, 3, 1, 0)).reshape(KDIM, C_OUT)

    # Fold eval-mode BatchNorm: scale into weights, shift (+ conv bias) into bias.
    bn_scale = gamma / jnp.sqrt(run_var + BN_EPS)                # (C_OUT,)
    w_mat = w_mat * bn_scale[None, :]                            # (KDIM, C_OUT)
    bias = ((b - run_mean) * bn_scale + beta).reshape(1, C_OUT)  # (1, C_OUT)

    cost = pl.CostEstimate(
        flops=2 * N * H_OUT * W_OUT * KDIM * C_OUT,
        transcendentals=0,
        bytes_accessed=4 * (N * H * W * C_IN + KDIM * C_OUT + C_OUT
                            + N * H_OUT * WO_PAD * C_PAD),
    )

    out = pl.pallas_call(
        downsample_kernel,
        out_shape=jax.ShapeDtypeStruct((N, H_OUT, WO_PAD, C_PAD), jnp.float32),
        grid=(N, H_OUT),
        in_specs=[
            pl.BlockSpec((None, H, 2, W // 2, C_IN),
                         lambda n, i: (n, 0, 0, 0, 0)),
            pl.BlockSpec((KDIM, C_OUT), lambda n, i: (0, 0)),
            pl.BlockSpec((1, C_OUT), lambda n, i: (0, 0)),
        ],
        out_specs=pl.BlockSpec((None, None, WO_PAD, C_PAD),
                               lambda n, i: (n, i, 0, 0)),
        compiler_params=pltpu.CompilerParams(
            dimension_semantics=("parallel", "parallel")),
        cost_estimate=cost,
    )(x_prep, w_mat, bias)

    out = out[:, :, :W_OUT, :C_TOT]              # strip sublane/lane padding
    return jnp.transpose(out, (0, 3, 1, 2))      # NHWC-ish -> NCHW


# ------------------------------ reference ------------------------------------
def downsample_reference(x_nchw, params):
    w, b, gamma, beta, run_mean, run_var = (
        params["w"], params["b"], params["gamma"], params["beta"],
        params["mean"], params["var"],
    )
    conv = lax.conv_general_dilated(
        x_nchw, w, window_strides=(S, S), padding="VALID",
        dimension_numbers=("NCHW", "OIHW", "NCHW"),
    ) + b.reshape(1, C_OUT, 1, 1)
    bn = (conv - run_mean.reshape(1, C_OUT, 1, 1)) / jnp.sqrt(
        run_var.reshape(1, C_OUT, 1, 1) + BN_EPS
    ) * gamma.reshape(1, C_OUT, 1, 1) + beta.reshape(1, C_OUT, 1, 1)
    y1 = jnp.maximum(bn, 0.0)
    y2 = lax.reduce_window(
        x_nchw, -jnp.inf, lax.max,
        window_dimensions=(1, 1, K, K), window_strides=(1, 1, S, S),
        padding="VALID",
    )
    return jnp.concatenate([y1, y2], axis=1)


# --------------------------------- main ---------------------------------------
if __name__ == "__main__":
    key = jax.random.PRNGKey(0)
    kx, kw, kb, kg, kbe, km, kv = jax.random.split(key, 7)

    x = jax.random.normal(kx, (N, C_IN, H, W), dtype=jnp.float32)

    # deterministic synthetic parameters (shapes per nn.Conv2d / nn.BatchNorm2d)
    params = {
        "w": 0.1 * jax.random.normal(kw, (C_OUT, C_IN, K, K), dtype=jnp.float32),
        "b": 0.05 * jax.random.normal(kb, (C_OUT,), dtype=jnp.float32),
        "gamma": 1.0 + 0.1 * jax.random.normal(kg, (C_OUT,), dtype=jnp.float32),
        "beta": 0.1 * jax.random.normal(kbe, (C_OUT,), dtype=jnp.float32),
        "mean": 0.1 * jax.random.normal(km, (C_OUT,), dtype=jnp.float32),
        "var": 1.0 + 0.1 * jnp.abs(jax.random.normal(kv, (C_OUT,), dtype=jnp.float32)),
    }

    out = jax.block_until_ready(downsample_forward(x, params))
    ref = jax.block_until_ready(downsample_reference(x, params))

    assert out.shape == (N, C_TOT, H_OUT, W_OUT), out.shape
    assert jnp.allclose(out, ref, atol=1e-4, rtol=1e-4), float(jnp.max(jnp.abs(out - ref)))
    print("KERNEL_OK")
</pallas_src>

<mosaic_0001>
module attributes {stable_mosaic.version = 11 : i64} {
  func.func @downsample_kernel(%arg0: i32, %arg1: i32, %arg2: memref<1x16x2x8x4xf32, #tpu.memory_space<vmem>>, %arg3: memref<36x8xf32, #tpu.memory_space<vmem>>, %arg4: memref<1x8xf32, #tpu.memory_space<vmem>>, %arg5: memref<1x1x8x128xf32, #tpu.memory_space<vmem>>) attributes {dimension_semantics = [#tpu.dimension_semantics<parallel>, #tpu.dimension_semantics<parallel>], iteration_bounds = array<i64: 2, 7>, scalar_prefetch = 0 : i64, scratch_operands = 0 : i64, tpu.core_type = #tpu.core_type<tc>, window_params = [{transform_indices = @transform_0, window_bounds = array<i64: 1, 16, 2, 8, 4>}, {pipeline_mode = #tpu.pipeline_mode<synchronous>, transform_indices = @transform_1, window_bounds = array<i64: 36, 8>}, {pipeline_mode = #tpu.pipeline_mode<synchronous>, transform_indices = @transform_2, window_bounds = array<i64: 1, 8>}, {transform_indices = @transform_3, window_bounds = array<i64: 1, 1, 8, 128>}]} {
    %c2_i32 = arith.constant 2 : i32
    %0 = arith.muli %c2_i32, %arg1 : i32
    %1 = tpu.assume_multiple %0, 2 : i32
    %c0 = arith.constant 0 : index
    %2 = arith.index_cast %1 : i32 to index
    %c0_0 = arith.constant 0 : index
    %c0_1 = arith.constant 0 : index
    %c0_2 = arith.constant 0 : index
    %3 = vector.load %arg2[%c0, %2, %c0_0, %c0_1, %c0_2] : memref<1x16x2x8x4xf32, #tpu.memory_space<vmem>>, vector<1x3x2x8x4xf32>
    %4 = vector.shape_cast %3 : vector<1x3x2x8x4xf32> to vector<3x2x8x4xf32>
    %5 = vector.extract_strided_slice %4 {offsets = [0, 0, 0, 0], sizes = [1, 1, 7, 4], strides = [1, 1, 1, 1]} : vector<3x2x8x4xf32> to vector<1x1x7x4xf32>
    %6 = vector.shape_cast %5 : vector<1x1x7x4xf32> to vector<7x4xf32>
    %7 = vector.extract_strided_slice %4 {offsets = [0, 1, 0, 0], sizes = [1, 1, 7, 4], strides = [1, 1, 1, 1]} : vector<3x2x8x4xf32> to vector<1x1x7x4xf32>
    %8 = vector.shape_cast %7 : vector<1x1x7x4xf32> to vector<7x4xf32>
    %9 = vector.extract_strided_slice %4 {offsets = [0, 0, 1, 0], sizes = [1, 1, 7, 4], strides = [1, 1, 1, 1]} : vector<3x2x8x4xf32> to vector<1x1x7x4xf32>
    %10 = vector.shape_cast %9 : vector<1x1x7x4xf32> to vector<7x4xf32>
    %11 = vector.extract_strided_slice %4 {offsets = [1, 0, 0, 0], sizes = [1, 1, 7, 4], strides = [1, 1, 1, 1]} : vector<3x2x8x4xf32> to vector<1x1x7x4xf32>
    %12 = vector.shape_cast %11 : vector<1x1x7x4xf32> to vector<7x4xf32>
    %13 = vector.extract_strided_slice %4 {offsets = [1, 1, 0, 0], sizes = [1, 1, 7, 4], strides = [1, 1, 1, 1]} : vector<3x2x8x4xf32> to vector<1x1x7x4xf32>
    %14 = vector.shape_cast %13 : vector<1x1x7x4xf32> to vector<7x4xf32>
    %15 = vector.extract_strided_slice %4 {offsets = [1, 0, 1, 0], sizes = [1, 1, 7, 4], strides = [1, 1, 1, 1]} : vector<3x2x8x4xf32> to vector<1x1x7x4xf32>
    %16 = vector.shape_cast %15 : vector<1x1x7x4xf32> to vector<7x4xf32>
    %17 = vector.extract_strided_slice %4 {offsets = [2, 0, 0, 0], sizes = [1, 1, 7, 4], strides = [1, 1, 1, 1]} : vector<3x2x8x4xf32> to vector<1x1x7x4xf32>
    %18 = vector.shape_cast %17 : vector<1x1x7x4xf32> to vector<7x4xf32>
    %19 = vector.extract_strided_slice %4 {offsets = [2, 1, 0, 0], sizes = [1, 1, 7, 4], strides = [1, 1, 1, 1]} : vector<3x2x8x4xf32> to vector<1x1x7x4xf32>
    %20 = vector.shape_cast %19 : vector<1x1x7x4xf32> to vector<7x4xf32>
    %21 = vector.extract_strided_slice %4 {offsets = [2, 0, 1, 0], sizes = [1, 1, 7, 4], strides = [1, 1, 1, 1]} : vector<3x2x8x4xf32> to vector<1x1x7x4xf32>
    %22 = vector.shape_cast %21 : vector<1x1x7x4xf32> to vector<7x4xf32>
    %23 = tpu.concatenate %6, %8, %10, %12, %14, %16, %18, %20, %22 in 1 : vector<7x4xf32>, vector<7x4xf32>, vector<7x4xf32>, vector<7x4xf32>, vector<7x4xf32>, vector<7x4xf32>, vector<7x4xf32>, vector<7x4xf32>, vector<7x4xf32> -> vector<7x36xf32>
    %c0_3 = arith.constant 0 : index
    %c0_4 = arith.constant 0 : index
    %24 = vector.load %arg3[%c0_3, %c0_4] : memref<36x8xf32, #tpu.memory_space<vmem>>, vector<36x8xf32>
    %cst = arith.constant dense<0.000000e+00> : vector<7x8xf32>
    %25 = tpu.matmul %23, %24, %cst {dimension_numbers = #tpu.dot_dimension_numbers<[1], [0], [0], [1], [0, 0, 1, 1], [], []>} : vector<7x36xf32>, vector<36x8xf32>, vector<7x8xf32> -> vector<7x8xf32>
    %c0_5 = arith.constant 0 : index
    %c0_6 = arith.constant 0 : index
    %26 = vector.load %arg4[%c0_5, %c0_6] : memref<1x8xf32, #tpu.memory_space<vmem>>, vector<1x8xf32>
    %27 = vector.broadcast %26 : vector<1x8xf32> to vector<7x8xf32>
    %28 = arith.addf %25, %27 : vector<7x8xf32>
    %cst_7 = arith.constant 0.000000e+00 : f32
    %29 = vector.broadcast %cst_7 : f32 to vector<7x8xf32>
    %30 = arith.maximumf %28, %29 : vector<7x8xf32>
    %31 = arith.maximumf %6, %8 : vector<7x4xf32>
    %32 = arith.maximumf %31, %10 : vector<7x4xf32>
    %33 = arith.maximumf %32, %12 : vector<7x4xf32>
    %34 = arith.maximumf %33, %14 : vector<7x4xf32>
    %35 = arith.maximumf %34, %16 : vector<7x4xf32>
    %36 = arith.maximumf %35, %18 : vector<7x4xf32>
    %37 = arith.maximumf %36, %20 : vector<7x4xf32>
    %38 = arith.maximumf %37, %22 : vector<7x4xf32>
    %cst_8 = arith.constant 0.000000e+00 : f32
    %39 = vector.broadcast %cst_8 : f32 to vector<7x116xf32>
    %40 = tpu.concatenate %30, %38, %39 in 1 : vector<7x8xf32>, vector<7x4xf32>, vector<7x116xf32> -> vector<7x128xf32>
    %cst_9 = arith.constant 0.000000e+00 : f32
    %41 = vector.broadcast %cst_9 : f32 to vector<1x128xf32>
    %42 = tpu.concatenate %40, %41 in 0 : vector<7x128xf32>, vector<1x128xf32> -> vector<8x128xf32>
    %c0_10 = arith.constant 0 : index
    %c0_11 = arith.constant 0 : index
    %c0_12 = arith.constant 0 : index
    %c0_13 = arith.constant 0 : index
    %43 = vector.load %arg5[%c0_10, %c0_11, %c0_12, %c0_13] : memref<1x1x8x128xf32, #tpu.memory_space<vmem>>, vector<1x1x8x128xf32>
    %44 = vector.shape_cast %43 : vector<1x1x8x128xf32> to vector<8x128xf32>
    %45 = vector.shape_cast %42 : vector<8x128xf32> to vector<1x1x8x128xf32>
    tpu.vector_store %arg5[%c0_10, %c0_11, %c0_12, %c0_13], %45 {strides = array<i32>} : memref<1x1x8x128xf32, #tpu.memory_space<vmem>>, vector<1x1x8x128xf32>,
    return
  }
  func.func @transform_0(%arg0: i32, %arg1: i32) -> (i32, i32, i32, i32, i32) {
    %c0_i32 = arith.constant 0 : i32
    %c0_i32_0 = arith.constant 0 : i32
    %c0_i32_1 = arith.constant 0 : i32
    %c0_i32_2 = arith.constant 0 : i32
    %c0_i32_3 = arith.constant 0 : i32
    return %arg0, %c0_i32, %c0_i32_0, %c0_i32_1, %c0_i32_2 : i32, i32, i32, i32, i32
  }
  func.func @transform_1(%arg0: i32, %arg1: i32) -> (i32, i32) {
    %c0_i32 = arith.constant 0 : i32
    %c0_i32_0 = arith.constant 0 : i32
    %c0_i32_1 = arith.constant 0 : i32
    return %c0_i32, %c0_i32_0 : i32, i32
  }
  func.func @transform_2(%arg0: i32, %arg1: i32) -> (i32, i32) {
    %c0_i32 = arith.constant 0 : i32
    %c0_i32_0 = arith.constant 0 : i32
    %c0_i32_1 = arith.constant 0 : i32
    return %c0_i32, %c0_i32_0 : i32, i32
  }
  func.func @transform_3(%arg0: i32, %arg1: i32) -> (i32, i32, i32, i32) {
    %c0_i32 = arith.constant 0 : i32
    %c0_i32_0 = arith.constant 0 : i32
    %c0_i32_1 = arith.constant 0 : i32
    return %arg0, %arg1, %c0_i32, %c0_i32_0 : i32, i32, i32, i32
  }
}

</mosaic_0001>

<llo_original>
// kernel: tpu_custom_call.1
$region0: #{tpu_custom_call.1}
  #allocation0 [shape = 'u32[]', space=smem, size = 0x4, offset = 0x4, fixed_abs, tag = 'smem constant byte address 0x4 - core index']
  #allocation1 [shape = 'u32[144,128]{1,0:T(1,128)}', space=vmem, size = 0x12000, scoped, tag = 'internal scratch']
  %s0 = inlined_call_operand.vmem [shape: f32[2,16,2,8,4], index: 0, kind: input, shape index: {}]
  %s1 = inlined_call_operand.vmem [shape: f32[36,8], index: 1, kind: input, shape index: {}]
  %s2 = inlined_call_operand.vmem [shape: f32[1,8], index: 2, kind: input, shape index: {}]
  %s3 = inlined_call_operand.hbm [shape: f32[2,7,8,128], index: 3, kind: output, shape index: {}]
  %s4 = sld [smem:[#allocation0]]
  $region45: #{tpu_custom_call.1} parent=0
    _
  %s6 = ssub.s32 1, %s4
  %s7 = scalar_select 0, %s6, %s4
  $region1: #{tpu_custom_call.1} parent=0
    #allocation2 [shape = 'u8[8192]{0}', space=vmem, size = 0x2000, scoped, tag = 'output window, operand 0']
    #allocation3 [shape = 's32[2]{0}', space=sflag, size = 0x8, scoped, tag = 'scoped memory for tpu_custom_call.1']
    %8 = vsyncpa [#allocation3], 0
    %s9 = scalar_lea.sflag [#allocation3], 1
    %10 = vsyncpa %s9, 0
    loop: start=0, step=1, limit=16
    $region2: #{tpu_custom_call.1} parent=1 // loop_pre_header
      _
    $region3: #{tpu_custom_call.1} parent=1 // loop_header
      %s12 = sphi 0, %s16
      %p13 = scmp.ge.s32.totalorder %s12, 16
      %s19 = sphi 0, %s31
      %s20 = sphi 0, %s27
      %s21 = sphi 0, %s19
      %s22 = sphi 0, %s20
      %s23 = sphi 0, %s21
      %s24 = sphi 0, %s22
      %s34 = sphi 0, %s36
      %s37 = sphi 0, %s34
      %s38 = sphi 0, %s37
      %s54 = sphi 0, %s38
      %s58 = sphi 0, %s58
      %s60 = sphi 0, %s58
      %s61 = sphi 0, %s60
      %s75 = sphi 0, %s61
      %s79 = sphi 0, %s79
      %s81 = sphi 0, %s79
      %s82 = sphi 0, %s81
      %s96 = sphi 0, %s82
      %s104 = sphi 0, %s106
      %s107 = sphi 0, %s104
      %s108 = sphi 0, %s107
      %s124 = sphi 0, %s108
    $region4: #{tpu_custom_call.1} parent=1 // loop_header_branch
      %15 = sbr.rel (%p13) target = $region8
    $region5: #{tpu_custom_call.1} parent=1 // loop_body
      %s17 = ssub.s32 %s12, 1
      %s18 = ssub.s32 %s12, 2
      %s25 = sadd.s32 1, %s20
      %p26 = scmp.ge.s32.totalorder %s25, 7
      %s27 = scalar_select %p26, 0, %s25
      %s28 = sadd.s32 1, %s19
      %s29 = scalar_select %p26, %s28, %s19
      %p30 = scmp.ge.s32.totalorder %s29, 2
      %s31 = scalar_select %p30, 0, %s29
      %s32 = ssub.s32 %s19, %s31
      %p33 = scmp.eq.s32.totalorder %s32, 0
      %s35 = sadd.s32 %s34, 1
      %s36 = scalar_select %p33, %s34, %s35
      %p39 = pneg %p33
      %p40 = scmp.eq.s32.totalorder %s12, 13
      %p41 = por %p39, %p40
      %p42 = scmp.ne.s32.totalorder %s34, %s37
      %p43 = scmp.eq.s32.totalorder %s12, 0
      %p44 = por %p42, %p43
      %p45 = scmp.ne.s32.totalorder %s34, %s37
      %p46 = scmp.eq.s32.totalorder %s17, 13
      %p47 = por %p45, %p46
      %p48 = scmp.ne.s32.totalorder %s37, %s38
      %p49 = scmp.eq.s32.totalorder %s17, 0
      %p50 = por %p48, %p49
      %p51 = scmp.ne.s32.totalorder %s37, %s38
      %p52 = scmp.eq.s32.totalorder %s18, 13
      %p53 = por %p51, %p52
      %p55 = scmp.ne.s32.totalorder %s38, %s54
      %p56 = scmp.eq.s32.totalorder %s18, 0
      %p57 = por %p55, %p56
      %s59 = sadd.s32 %s58, 1
      %p62 = scmp.eq.s32.totalorder %s12, 13
      %p63 = scmp.ne.s32.totalorder %s58, %s60
      %p64 = scmp.eq.s32.totalorder %s12, 0
      %p65 = por %p63, %p64
      %p66 = scmp.ne.s32.totalorder %s58, %s60
      %p67 = scmp.eq.s32.totalorder %s17, 13
      %p68 = por %p66, %p67
      %p69 = scmp.ne.s32.totalorder %s60, %s61
      %p70 = scmp.eq.s32.totalorder %s17, 0
      %p71 = por %p69, %p70
      %p72 = scmp.ne.s32.totalorder %s60, %s61
      %p73 = scmp.eq.s32.totalorder %s18, 13
      %p74 = por %p72, %p73
      %p76 = scmp.ne.s32.totalorder %s61, %s75
      %p77 = scmp.eq.s32.totalorder %s18, 0
      %p78 = por %p76, %p77
      %s80 = sadd.s32 %s79, 1
      %p83 = scmp.eq.s32.totalorder %s12, 13
      %p84 = scmp.ne.s32.totalorder %s79, %s81
      %p85 = scmp.eq.s32.totalorder %s12, 0
      %p86 = por %p84, %p85
      %p87 = scmp.ne.s32.totalorder %s79, %s81
      %p88 = scmp.eq.s32.totalorder %s17, 13
      %p89 = por %p87, %p88
      %p90 = scmp.ne.s32.totalorder %s81, %s82
      %p91 = scmp.eq.s32.totalorder %s17, 0
      %p92 = por %p90, %p91
      %p93 = scmp.ne.s32.totalorder %s81, %s82
      %p94 = scmp.eq.s32.totalorder %s18, 13
      %p95 = por %p93, %p94
      %p97 = scmp.ne.s32.totalorder %s82, %s96
      %p98 = scmp.eq.s32.totalorder %s18, 0
      %p99 = por %p97, %p98
      %s100 = ssub.s32 %s19, %s31
      %s101 = ssub.s32 %s20, %s27
      %s102 = sor.u32 %s100, %s101
      %p103 = scmp.eq.s32.totalorder %s102, 0
      %s105 = sadd.s32 %s104, 1
      %s106 = scalar_select %p103, %s104, %s105
      %p109 = pneg %p103
      %p110 = scmp.eq.s32.totalorder %s12, 13
      %p111 = por %p109, %p110
      %p112 = scmp.ne.s32.totalorder %s104, %s107
      %p113 = scmp.eq.s32.totalorder %s12, 0
      %p114 = por %p112, %p113
      %p115 = scmp.ne.s32.totalorder %s104, %s107
      %p116 = scmp.eq.s32.totalorder %s17, 13
      %p117 = por %p115, %p116
      %p118 = scmp.ne.s32.totalorder %s107, %s108
      %p119 = scmp.eq.s32.totalorder %s17, 0
      %p120 = por %p118, %p119
      %p121 = scmp.ne.s32.totalorder %s107, %s108
      %p122 = scmp.eq.s32.totalorder %s18, 13
      %p123 = por %p121, %p122
      %p125 = scmp.ne.s32.totalorder %s108, %s124
      %p126 = scmp.eq.s32.totalorder %s18, 0
      %p127 = por %p125, %p126
      %p128 = scmp.le.s32.totalorder 1, %s12
      %p129 = scmp.lt.s32.totalorder %s12, 15
      %p130 = pnand %p128, %p129
      %p131 = pneg %p130
      // Predicated region
      $region9: #{tpu_custom_call.1} parent=5 // pred_check
        _
      $region10: #{tpu_custom_call.1} parent=5 // pred_check_branch
        %133 = sbr.rel (%p130) target = $region12
      $region11: #{tpu_custom_call.1} parent=5 // pred_region
        %s134 = ssub.s32 %s12, 1
        // Predicated region
        $region13: #{tpu_custom_call.1} parent=11 // pred_check
          %p135 = pneg %p71
        $region14: #{tpu_custom_call.1} parent=11 // pred_check_branch
          %137 = sbr.rel (%p135) target = $region16
        $region15: #{tpu_custom_call.1} parent=11 // pred_region
          _
        $region16: #{tpu_custom_call.1} parent=11 // pred_fallthru
          _
        // Predicated region
        $region17: #{tpu_custom_call.1} parent=11 // pred_check
          %p138 = pneg %p92
        $region18: #{tpu_custom_call.1} parent=11 // pred_check_branch
          %140 = sbr.rel (%p138) target = $region20
        $region19: #{tpu_custom_call.1} parent=11 // pred_region
          _
        $region20: #{tpu_custom_call.1} parent=11 // pred_fallthru
          _
      $region12: #{tpu_custom_call.1} parent=5 // pred_fallthru
        _
      %p141 = scmp.lt.s32.totalorder %s12, 14
      // Predicated region
      $region21: #{tpu_custom_call.1} parent=5 // pred_check
        %p142 = pneg %p141
      $region22: #{tpu_custom_call.1} parent=5 // pred_check_branch
        %144 = sbr.rel (%p142) target = $region24
      $region23: #{tpu_custom_call.1} parent=5 // pred_region
        // Predicated region
        $region25: #{tpu_custom_call.1} parent=23 // pred_check
          %p145 = pneg %p44
        $region26: #{tpu_custom_call.1} parent=23 // pred_check_branch
          %147 = sbr.rel (%p145) target = $region28
        $region27: #{tpu_custom_call.1} parent=23 // pred_region
          %p148 = scmp.lt.s32.totalorder %s19, 1
          %s149 = scalar_select %p148, %s19, 1
          %s150 = smul.addr %s149, 32
          %s151 = smul.addr %s150, 8
          %s152 = scalar_lea.vmem %s0, %s151
        $region28: #{tpu_custom_call.1} parent=23 // pred_fallthru
          _
      $region24: #{tpu_custom_call.1} parent=5 // pred_fallthru
        _
      %p153 = scmp.le.s32.totalorder 1, %s12
      %p154 = scmp.lt.s32.totalorder %s12, 15
      %p155 = pnand %p153, %p154
      %p156 = pneg %p155
      // Predicated region
      $region29: #{tpu_custom_call.1} parent=5 // pred_check
        _
      $region30: #{tpu_custom_call.1} parent=5 // pred_check_branch
        %158 = sbr.rel (%p155) target = $region32
      $region31: #{tpu_custom_call.1} parent=5 // pred_region
        %s159 = ssub.s32 %s12, 1
        %p160 = scmp.lt.s32.totalorder %s21, 1
        %s161 = scalar_select %p160, %s21, 1
        %s162 = smul.addr %s161, 32
        %s163 = smul.addr %s162, 8
        %s164 = scalar_lea.vmem %s0, %s163
        %p165 = pneg %p50
        %p166 = pneg %p47
        %p167 = pneg %p71
        %p168 = pneg %p68
        %p169 = pneg %p92
        %p170 = pneg %p89
        %p171 = pneg %p120
        %p172 = pneg %p117
        %s173 = sand.u32 %s107, 1
        %s174 = scalar_lea.sflag [#allocation3], %s173
        %s175 = sand.u32 %s107, 1
        %s176 = smul.addr %s175, 8
        %s177 = scalar_lea.vmem [#allocation2], %s176
        %p178 = scmp.lt.s32.totalorder %s21, 1
        %s179 = scalar_select %p178, %s21, 1
        %s180 = smul.addr %s179, 32
        %s181 = smul.addr %s180, 8
        %s182 = scalar_lea.vmem %s0, %s181
        %s183 = smul.u32 %s22, 2
        %s184 = smul.u32 %s183, 16
        %s185 = scalar_lea.vmem %s182, %s184
        %v186 = vld [vmem:[%s185] sm:$0xff]
        %v187 = vld [vmem:[%s185 + $0x8] sm:$0xff]
        %v188 = vld [vmem:[%s185 + $0x10] sm:$0xff]
        %v189 = vld [vmem:[%s185 + $0x18] sm:$0xff]
        %v190 = vld [vmem:[%s185 + $0x20] sm:$0xff]
        %v191 = vld [vmem:[%s185 + $0x28] sm:$0xff]
        %193 = vrot.lane.b32.xlu0 %v187, 4
        %v194 = vpop.permute.xlu0 %193
        %v197 = vrot.slane %v186, 1
        %198 = vrot.lane.b32.xlu0 %v197, 8
        %v199 = vpop.permute.xlu0 %198
        %202 = vrot.lane.b32.xlu0 %v188, 12
        %v203 = vpop.permute.xlu0 %202
        %206 = vrot.lane.b32.xlu0 %v189, 16
        %v207 = vpop.permute.xlu0 %206
        %v209 = vrot.slane %v188, 1
        %210 = vrot.lane.b32.xlu0 %v209, 20
        %v211 = vpop.permute.xlu0 %210
        %214 = vrot.lane.b32.xlu0 %v190, 24
        %v215 = vpop.permute.xlu0 %214
        %218 = vrot.lane.b32.xlu0 %v191, 28
        %v219 = vpop.permute.xlu0 %218
        %v221 = vrot.slane %v190, 1
        %222 = vrot.lane.b32.xlu0 %v221, 32
        %v223 = vpop.permute.xlu0 %222
        %vm225 = vcmask 31744
        %v226 = vsel %vm225, %v186, %v194
        %vm227 = vcmask 64512
        %v228 = vsel %vm227, %v226, %v199
        %vm229 = vcmask 97280
        %v230 = vsel %vm229, %v228, %v203
        %vm231 = vcmask 130048
        %v232 = vsel %vm231, %v230, %v207
        %vm233 = vcmask 162816
        %v234 = vsel %vm233, %v232, %v211
        %vm235 = vcmask 195584
        %v236 = vsel %vm235, %v234, %v215
        %vm237 = vcmask 228352
        %v238 = vsel %vm237, %v236, %v219
        %vm239 = vcmask 261120
        %v240 = vsel %vm239, %v238, %v223
        %v241 = vld [vmem:[%s1] sm:$0xff]
        %v242 = vld [vmem:[%s1 + $0x8] sm:$0xff]
        %v243 = vld [vmem:[%s1 + $0x10] sm:$0xff]
        %v244 = vld [vmem:[%s1 + $0x18] sm:$0xff]
        %v245 = vld [vmem:[%s1 + $0x20] sm:$0xf]
        %v246 = vld [vmem:[%s2] sm:$0x1]
        %v248 = vlaneseq
        %v249 = vshrl.u32 %v248, 7
        %v250 = vsub.s32 0, %v249
        %v251 = vrot.slane %v246, %v250
        %vm253 = vcmask 293888
        %v255 = vsel %vm253, %v240, 0
        %vm257 = vcmask 1043456
        %v259 = vsel %vm257, %v245, 0
        %261 = vmatprep.subr.mxu0 0.0
        %262 = vmatpush1.msra.mxu0 %v241
        %263 = vmatprep.subr.mxu0 0.0
        %264 = vmatpush1.msra.mxu0 %v242
        %265 = vmatprep.subr.mxu0 0.0
        %266 = vmatpush1.msra.mxu0 %v243
        %267 = vmatprep.subr.mxu0 0.0
        %268 = vmatpush1.msra.mxu0 %v244
        %269 = vmatprep.subr.mxu0 0.0
        %270 = vmatpush1.msra.mxu0 %v259
        %271 = vmatprep.subr.mxu0 0.0
        %272 = vmatpush1.msra.mxu0 0.0
        %273 = vmatprep.subr.mxu0 0.0
        %274 = vmatpush1.msra.mxu0 0.0
        %275 = vmatprep.subr.mxu0 0.0
        %276 = vmatpush1.msra.mxu0 0.0
        %277 = vmatprep.subr.mxu0 0.0
        %278 = vmatpush1.msra.mxu0 0.0
        %279 = vmatprep.subr.mxu0 0.0
        %280 = vmatpush1.msra.mxu0 0.0
        %281 = vmatprep.subr.mxu0 0.0
        %282 = vmatpush1.msra.mxu0 0.0
        %283 = vmatprep.subr.mxu0 0.0
        %284 = vmatpush1.msra.mxu0 0.0
        %285 = vmatprep.subr.mxu0 0.0
        %286 = vmatpush1.msra.mxu0 0.0
        %287 = vmatprep.subr.mxu0 0.0
        %288 = vmatpush1.msra.mxu0 0.0
        %289 = vmatprep.subr.mxu0 0.0
        %290 = vmatpush1.msra.mxu0 0.0
        %291 = vmatprep.subr.mxu0 0.0
        %292 = vmatpush1.msra.mxu0 0.0
        %293 = vmatprep.subr.mxu0 0.0
        %294 = vmatpush1.msra.mxu0 0.0
        %295 = vmatprep.subr.mxu0 0.0
        %296 = vmatpush1.msra.mxu0 0.0
        %297 = vmatprep.subr.mxu0 0.0
        %298 = vmatpush1.msra.mxu0 0.0
        %299 = vmatprep.subr.mxu0 0.0
        %300 = vmatpush1.msra.mxu0 0.0
        %301 = vmatprep.subr.mxu0 0.0
        %302 = vmatpush1.msra.mxu0 0.0
        %303 = vmatprep.subr.mxu0 0.0
        %304 = vmatpush1.msra.mxu0 0.0
        %305 = vmatprep.subr.mxu0 0.0
        %306 = vmatpush1.msra.mxu0 0.0
        %307 = vmatprep.subr.mxu0 0.0
        %308 = vmatpush1.msra.mxu0 0.0
        %309 = vmatprep.subr.mxu0 0.0
        %310 = vmatpush1.msra.mxu0 0.0
        %311 = vmatprep.subr.mxu0 0.0
        %312 = vmatpush1.msra.mxu0 0.0
        %313 = vmatprep.subr.mxu0 0.0
        %314 = vmatpush1.msra.mxu0 0.0
        %315 = vmatprep.subr.mxu0 0.0
        %316 = vmatpush1.msra.mxu0 0.0
        %317 = vmatprep.subr.mxu0 0.0
        %318 = vmatpush1.msra.mxu0 0.0
        %319 = vmatprep.subr.mxu0 0.0
        %320 = vmatpush1.msra.mxu0 0.0
        %321 = vmatprep.subr.mxu0 0.0
        %322 = vmatpush1.msra.mxu0 0.0
        %323 = vmatprep.subr.mxu0 0.0
        %324 = vmatpush1.msra.mxu0 0.0
        %325 = vmatprep.mubr.f32.mxu0 0.0
        %326 = vmatmul.mubr.f32.gmra.mrb[0].mxu0 %v255
        %v327 = vpop.f32.mrb[0].mxu0
        %v328 = vadd.f32 %v251, %v327
        %v329 = vpop.f32.mrb[0].mxu0
        %330 = vdwg.mxu0
        %v331 = vmax.f32 %v328, 0.0
        %v332 = vmax.f32 %v186, %v187
        %v334 = vmax.f32 %v332, %v197
        %v335 = vmax.f32 %v334, %v188
        %v336 = vmax.f32 %v335, %v189
        %v338 = vmax.f32 %v336, %v209
        %v339 = vmax.f32 %v338, %v190
        %v340 = vmax.f32 %v339, %v191
        %v342 = vmax.f32 %v340, %v221
        %344 = vrot.lane.b32.xlu0 %v342, 8
        %v345 = vpop.permute.xlu0 %344
        %v347 = vsel %vm227, %v331, %v345
        %v348 = vsel %vm229, %v347, 0.0
        %vm349 = vcmask 1046528
        %v350 = vsel %vm349, %v348, 0.0
        %351 = vst [vmem:[%s177] sm:$0xff] %v350
        %s352 = sand.u32 %s107, 1
        %s353 = scalar_lea.sflag [#allocation3], %s352
        %s354 = sand.u32 %s107, 1
        %s355 = smul.addr %s354, 8
        %s356 = scalar_lea.vmem [#allocation2], %s355
        // Predicated region
        $region33: #{tpu_custom_call.1} parent=31 // pred_check
          %p357 = pneg %p117
        $region34: #{tpu_custom_call.1} parent=31 // pred_check_branch
          %359 = sbr.rel (%p357) target = $region36
        $region35: #{tpu_custom_call.1} parent=31 // pred_region
          %s361 = ssub.s32 128, 128
          %362 = vsyncadd %s353, %s361
          %s363 = smul.addr %s21, 7
          %s364 = sadd.s32 %s22, %s363
          %s365 = smul.addr %s364, 128
          %s366 = scalar_lea.hbm %s3, %s365
          %s368 = sshll.u32 %s356, 4
          %s369 = int_to_ptr.vmem [resolvable:$true] %s368
          %371 = dma.vmem_to_hbm [thread:$0]  %s369, 128, %s366, %s353
        $region36: #{tpu_custom_call.1} parent=31 // pred_fallthru
          _
      $region32: #{tpu_custom_call.1} parent=5 // pred_fallthru
        _
      %p372 = scmp.le.s32.totalorder 2, %s12
      // Predicated region
      $region37: #{tpu_custom_call.1} parent=5 // pred_check
        %p373 = pneg %p372
      $region38: #{tpu_custom_call.1} parent=5 // pred_check_branch
        %375 = sbr.rel (%p373) target = $region40
      $region39: #{tpu_custom_call.1} parent=5 // pred_region
        %s376 = ssub.s32 %s12, 2
        // Predicated region
        $region41: #{tpu_custom_call.1} parent=39 // pred_check
          %p377 = pneg %p123
        $region42: #{tpu_custom_call.1} parent=39 // pred_check_branch
          %379 = sbr.rel (%p377) target = $region44
        $region43: #{tpu_custom_call.1} parent=39 // pred_region
          %s380 = sand.u32 %s108, 1
          %s381 = scalar_lea.sflag [#allocation3], %s380
          %s382 = sand.u32 %s108, 1
          %s383 = smul.addr %s382, 8
          %s384 = scalar_lea.vmem [#allocation2], %s383
          %385 = dma.done %s381, 128
        $region44: #{tpu_custom_call.1} parent=39 // pred_fallthru
          _
      $region40: #{tpu_custom_call.1} parent=5 // pred_fallthru
        _
    $region6: #{tpu_custom_call.1} parent=1 // loop_footer
      %s16 = sadd.s32 1, %s12
    $region7: #{tpu_custom_call.1} parent=1 // loop_footer_branch
      %11 = sbr.rel target = $region3
    $region8: #{tpu_custom_call.1} parent=1 // loop_exit
      _
    %386 = vsyncpa [#allocation3], 1
    %s387 = scalar_lea.sflag [#allocation3], 1
    %388 = vsyncpa %s387, 1

</llo_original>
